<compile_context>
chip_gen: v5e
topology: v5e:2x2
jax: 0.10.0
libtpu: 0.0.40
codegen_flags: <defaults>
</compile_context>

<pallas_src>
import functools

import jax
import jax.numpy as jnp
from jax import lax
from jax.experimental import pallas as pl
from jax.experimental.pallas import tpu as pltpu

_SQRT_HALF = 0.7071067811865476


def _erf(x):
    # Abramowitz & Stegun 7.1.26 rational approximation, |abs err| < 1.5e-7.
    # TODO(synk): replace with lax.erf once a Mosaic erf lowering is guaranteed.
    p = 0.3275911
    a1, a2, a3, a4, a5 = (0.254829592, -0.284496736, 1.421413741,
                          -1.453152027, 1.061405429)
    ax = jnp.abs(x)
    t = 1.0 / (1.0 + p * ax)
    poly = ((((a5 * t + a4) * t + a3) * t + a2) * t + a1) * t
    y = 1.0 - poly * jnp.exp(-ax * ax)
    return jnp.where(x >= 0, y, -y)


def _gelu(x):
    # Exact BERT GELU: x * 0.5 * (1 + erf(x / sqrt(2))).
    return 0.5 * x * (1.0 + _erf(x * _SQRT_HALF))


def _mlm_head_kernel(x_ref, w1_ref, b1_ref, gamma_ref, beta_ref,
                     wd_ref, bv_ref, o_ref, t_ref, *, eps):
    j = pl.program_id(1)

    @pl.when(j == 0)
    def _():
        # Dense H->H on the MXU; weight is (H_out, H_in), contracted on H_in.
        h = lax.dot_general(
            x_ref[...], w1_ref[...],
            dimension_numbers=(((1,), (1,)), ((), ())),
            preferred_element_type=jnp.float32)
        h = h + b1_ref[...]                              # f32 bias add
        h = _gelu(h)                                     # exact (erf) GELU
        mu = jnp.mean(h, axis=-1, keepdims=True)         # LayerNorm over H
        c = h - mu
        var = jnp.mean(c * c, axis=-1, keepdims=True)
        h = c * lax.rsqrt(var + eps)
        h = h * gamma_ref[...] + beta_ref[...]
        t_ref[...] = h.astype(t_ref.dtype)               # bf16 scratch, reused over j

    # Decoder H -> vocab tile on the MXU (bf16 operands, f32 accumulation).
    logits = lax.dot_general(
        t_ref[...], wd_ref[...],
        dimension_numbers=(((1,), (1,)), ((), ())),
        preferred_element_type=jnp.float32)
    logits = logits + bv_ref[...]
    o_ref[...] = logits.astype(o_ref.dtype)


def _pick_tile(dim, candidates):
    for t in candidates:
        if t <= dim and dim % t == 0:
            return t
    return dim


def _pad_to(x, axis, mult):
    pad = (-x.shape[axis]) % mult
    if pad == 0:
        return x
    widths = [(0, 0)] * x.ndim
    widths[axis] = (0, pad)
    return jnp.pad(x, widths)


def bert_only_mlm_head(sequence_output, dense_w, dense_b, ln_gamma, ln_beta,
                       decoder_w, decoder_b, *, layer_norm_eps=1e-12):
    """sequence_output: (B,S,H); dense_w: (H,H); decoder_w: (V,H) (PyTorch layouts)."""
    B, S, H = sequence_output.shape
    V = decoder_w.shape[0]
    M = B * S

    # bf16 matmul operands (in deployment the weights would already be bf16);
    # biases / LayerNorm params stay f32.
    x2d = sequence_output.reshape(M, H).astype(jnp.bfloat16)
    w1 = dense_w.astype(jnp.bfloat16)            # (H_out, H_in) — no transpose
    wd = decoder_w.astype(jnp.bfloat16)          # (V, H)        — no transpose

    b1 = dense_b.reshape(1, H).astype(jnp.float32)
    gm = ln_gamma.reshape(1, H).astype(jnp.float32)
    bt = ln_beta.reshape(1, H).astype(jnp.float32)
    bv = decoder_b.reshape(1, V).astype(jnp.float32)

    # Pad rows to a sublane multiple and vocab to a lane-dense multiple of 128.
    x2d = _pad_to(x2d, 0, 8)
    wd = _pad_to(wd, 0, 128)
    bv = _pad_to(bv, 1, 128)
    Mp, Vp = x2d.shape[0], wd.shape[0]

    tm = _pick_tile(Mp, (256, 128, 64, 32, 16, 8))
    tn = _pick_tile(Vp, (512, 256, 128))

    kernel = functools.partial(_mlm_head_kernel, eps=layer_norm_eps)

    out = pl.pallas_call(
        kernel,
        out_shape=jax.ShapeDtypeStruct((Mp, Vp), sequence_output.dtype),
        grid_spec=pltpu.PrefetchScalarGridSpec(
            num_scalar_prefetch=0,
            grid=(Mp // tm, Vp // tn),
            in_specs=[
                pl.BlockSpec((tm, H), lambda i, j: (i, 0)),   # activation rows
                pl.BlockSpec((H, H), lambda i, j: (0, 0)),    # dense weight (resident)
                pl.BlockSpec((1, H), lambda i, j: (0, 0)),    # dense bias
                pl.BlockSpec((1, H), lambda i, j: (0, 0)),    # LayerNorm gamma
                pl.BlockSpec((1, H), lambda i, j: (0, 0)),    # LayerNorm beta
                pl.BlockSpec((tn, H), lambda i, j: (j, 0)),   # decoder weight tile
                pl.BlockSpec((1, tn), lambda i, j: (0, j)),   # decoder bias tile
            ],
            out_specs=pl.BlockSpec((tm, tn), lambda i, j: (i, j)),
            scratch_shapes=[pltpu.VMEM((tm, H), jnp.bfloat16)],  # transformed rows
        ),
        compiler_params=pltpu.CompilerParams(
            dimension_semantics=("parallel", "arbitrary"),
            vmem_limit_bytes=32 * 1024 * 1024,
        ),
    )(x2d, w1, b1, gm, bt, wd, bv)

    return out[:M, :V].reshape(B, S, V)


def bert_only_mlm_head_ref(sequence_output, dense_w, dense_b, ln_gamma, ln_beta,
                           decoder_w, decoder_b, *, layer_norm_eps=1e-12):
    """Pure-JAX reference mirroring the kernel's bf16-operand / f32-accum numerics."""
    B, S, H = sequence_output.shape
    x = sequence_output.reshape(-1, H).astype(jnp.bfloat16)
    h = jnp.einsum("mh,oh->mo", x, dense_w.astype(jnp.bfloat16),
                   preferred_element_type=jnp.float32)
    h = h + dense_b.astype(jnp.float32)
    h = jax.nn.gelu(h, approximate=False)                 # exact erf GELU
    mu = jnp.mean(h, axis=-1, keepdims=True)
    var = jnp.mean((h - mu) ** 2, axis=-1, keepdims=True)
    h = (h - mu) * lax.rsqrt(var + layer_norm_eps)
    h = h * ln_gamma + ln_beta
    logits = jnp.einsum("mh,vh->mv", h.astype(jnp.bfloat16),
                        decoder_w.astype(jnp.bfloat16),
                        preferred_element_type=jnp.float32)
    logits = logits + decoder_b
    return logits.reshape(B, S, -1).astype(sequence_output.dtype)


if __name__ == "__main__":
    B, S, H, V = 2, 8, 32, 128   # small test shapes; V kept lane-dense (x128)
    key = jax.random.PRNGKey(0)
    ks = jax.random.split(key, 7)

    sequence_output = jax.random.normal(ks[0], (B, S, H), dtype=jnp.float32)

    bound = 1.0 / (H ** 0.5)     # nn.Linear-style init
    dense_w = jax.random.uniform(ks[1], (H, H), minval=-bound, maxval=bound,
                                 dtype=jnp.float32)
    dense_b = jax.random.uniform(ks[2], (H,), minval=-bound, maxval=bound,
                                 dtype=jnp.float32)
    ln_gamma = 1.0 + 0.1 * jax.random.normal(ks[3], (H,), dtype=jnp.float32)
    ln_beta = 0.1 * jax.random.normal(ks[4], (H,), dtype=jnp.float32)
    decoder_w = jax.random.uniform(ks[5], (V, H), minval=-bound, maxval=bound,
                                   dtype=jnp.float32)
    decoder_b = 0.1 * jax.random.normal(ks[6], (V,), dtype=jnp.float32)

    out = bert_only_mlm_head(sequence_output, dense_w, dense_b, ln_gamma, ln_beta,
                             decoder_w, decoder_b)
    out = jax.block_until_ready(out)

    ref = bert_only_mlm_head_ref(sequence_output, dense_w, dense_b, ln_gamma,
                                 ln_beta, decoder_w, decoder_b)

    assert out.shape == (B, S, V)
    assert jnp.allclose(out, ref, atol=2e-2, rtol=2e-2), (
        "mismatch vs reference: max abs diff = "
        f"{jnp.max(jnp.abs(out - ref))}")

    print("KERNEL_OK")
</pallas_src>

<mosaic_0001>
module attributes {stable_mosaic.version = 11 : i64} {
  func.func @_mlm_head_kernel(%arg0: i32, %arg1: i32, %arg2: memref<16x32xbf16, #tpu.memory_space<vmem>>, %arg3: memref<32x32xbf16, #tpu.memory_space<vmem>>, %arg4: memref<1x32xf32, #tpu.memory_space<vmem>>, %arg5: memref<1x32xf32, #tpu.memory_space<vmem>>, %arg6: memref<1x32xf32, #tpu.memory_space<vmem>>, %arg7: memref<128x32xbf16, #tpu.memory_space<vmem>>, %arg8: memref<1x128xf32, #tpu.memory_space<vmem>>, %arg9: memref<16x128xf32, #tpu.memory_space<vmem>>, %arg10: memref<16x32xbf16, #tpu.memory_space<vmem>>) attributes {dimension_semantics = [#tpu.dimension_semantics<parallel>, #tpu.dimension_semantics<arbitrary>], iteration_bounds = array<i64: 1, 1>, scalar_prefetch = 0 : i64, scratch_operands = 1 : i64, tpu.core_type = #tpu.core_type<tc>, window_params = [{transform_indices = @transform_0, window_bounds = array<i64: 16, 32>}, {pipeline_mode = #tpu.pipeline_mode<synchronous>, transform_indices = @transform_1, window_bounds = array<i64: 32, 32>}, {pipeline_mode = #tpu.pipeline_mode<synchronous>, transform_indices = @transform_2, window_bounds = array<i64: 1, 32>}, {pipeline_mode = #tpu.pipeline_mode<synchronous>, transform_indices = @transform_3, window_bounds = array<i64: 1, 32>}, {pipeline_mode = #tpu.pipeline_mode<synchronous>, transform_indices = @transform_4, window_bounds = array<i64: 1, 32>}, {transform_indices = @transform_5, window_bounds = array<i64: 128, 32>}, {transform_indices = @transform_6, window_bounds = array<i64: 1, 128>}, {transform_indices = @transform_7, window_bounds = array<i64: 16, 128>}]} {
    %c0_i32 = arith.constant 0 : i32
    %0 = arith.cmpi eq, %arg1, %c0_i32 : i32
    %1 = arith.extui %0 : i1 to i32
    %c0_i32_0 = arith.constant 0 : i32
    %2 = arith.cmpi ne, %1, %c0_i32_0 : i32
    scf.if %2 {
      %c0_8 = arith.constant 0 : index
      %c0_9 = arith.constant 0 : index
      %10 = vector.load %arg2[%c0_8, %c0_9] : memref<16x32xbf16, #tpu.memory_space<vmem>>, vector<16x32xbf16>
      %c0_10 = arith.constant 0 : index
      %c0_11 = arith.constant 0 : index
      %11 = vector.load %arg3[%c0_10, %c0_11] : memref<32x32xbf16, #tpu.memory_space<vmem>>, vector<32x32xbf16>
      %cst_12 = arith.constant dense<0.000000e+00> : vector<16x32xf32>
      %12 = tpu.matmul %10, %11, %cst_12 {dimension_numbers = #tpu.dot_dimension_numbers<[1], [1], [0], [0], [0, 0, 1, 0], [], []>} : vector<16x32xbf16>, vector<32x32xbf16>, vector<16x32xf32> -> vector<16x32xf32>
      %c0_13 = arith.constant 0 : index
      %c0_14 = arith.constant 0 : index
      %13 = vector.load %arg4[%c0_13, %c0_14] : memref<1x32xf32, #tpu.memory_space<vmem>>, vector<1x32xf32>
      %14 = vector.broadcast %13 : vector<1x32xf32> to vector<16x32xf32>
      %15 = arith.addf %12, %14 : vector<16x32xf32>
      %cst_15 = arith.constant 5.000000e-01 : f32
      %16 = vector.broadcast %cst_15 : f32 to vector<16x32xf32>
      %17 = arith.mulf %16, %15 : vector<16x32xf32>
      %cst_16 = arith.constant 0.707106769 : f32
      %18 = vector.broadcast %cst_16 : f32 to vector<16x32xf32>
      %19 = arith.mulf %15, %18 : vector<16x32xf32>
      %20 = math.absf %19 : vector<16x32xf32>
      %cst_17 = arith.constant 0.327591091 : f32
      %21 = vector.broadcast %cst_17 : f32 to vector<16x32xf32>
      %22 = arith.mulf %21, %20 : vector<16x32xf32>
      %cst_18 = arith.constant 1.000000e+00 : f32
      %23 = vector.broadcast %cst_18 : f32 to vector<16x32xf32>
      %24 = arith.addf %23, %22 : vector<16x32xf32>
      %cst_19 = arith.constant 1.000000e+00 : f32
      %25 = vector.broadcast %cst_19 : f32 to vector<16x32xf32>
      %26 = arith.divf %25, %24 : vector<16x32xf32>
      %cst_20 = arith.constant 1.06140542 : f32
      %27 = vector.broadcast %cst_20 : f32 to vector<16x32xf32>
      %28 = arith.mulf %27, %26 : vector<16x32xf32>
      %cst_21 = arith.constant -1.45315206 : f32
      %29 = vector.broadcast %cst_21 : f32 to vector<16x32xf32>
      %30 = arith.addf %28, %29 : vector<16x32xf32>
      %31 = arith.mulf %30, %26 : vector<16x32xf32>
      %cst_22 = arith.constant 1.42141378 : f32
      %32 = vector.broadcast %cst_22 : f32 to vector<16x32xf32>
      %33 = arith.addf %31, %32 : vector<16x32xf32>
      %34 = arith.mulf %33, %26 : vector<16x32xf32>
      %cst_23 = arith.constant -0.284496725 : f32
      %35 = vector.broadcast %cst_23 : f32 to vector<16x32xf32>
      %36 = arith.addf %34, %35 : vector<16x32xf32>
      %37 = arith.mulf %36, %26 : vector<16x32xf32>
      %cst_24 = arith.constant 0.254829586 : f32
      %38 = vector.broadcast %cst_24 : f32 to vector<16x32xf32>
      %39 = arith.addf %37, %38 : vector<16x32xf32>
      %40 = arith.mulf %39, %26 : vector<16x32xf32>
      %cst_25 = arith.constant 0.000000e+00 : f32
      %41 = vector.broadcast %cst_25 : f32 to vector<16x32xf32>
      %42 = arith.subf %41, %20 : vector<16x32xf32>
      %43 = arith.mulf %42, %20 : vector<16x32xf32>
      %44 = math.exp %43 : vector<16x32xf32>
      %45 = arith.mulf %40, %44 : vector<16x32xf32>
      %cst_26 = arith.constant 1.000000e+00 : f32
      %46 = vector.broadcast %cst_26 : f32 to vector<16x32xf32>
      %47 = arith.subf %46, %45 : vector<16x32xf32>
      %cst_27 = arith.constant 0.000000e+00 : f32
      %48 = vector.broadcast %cst_27 : f32 to vector<16x32xf32>
      %49 = arith.cmpf oge, %19, %48 : vector<16x32xf32>
      %cst_28 = arith.constant 0.000000e+00 : f32
      %50 = vector.broadcast %cst_28 : f32 to vector<16x32xf32>
      %51 = arith.subf %50, %47 : vector<16x32xf32>
      %52 = arith.select %49, %47, %51 : vector<16x32xi1>, vector<16x32xf32>
      %cst_29 = arith.constant 1.000000e+00 : f32
      %53 = vector.broadcast %cst_29 : f32 to vector<16x32xf32>
      %54 = arith.addf %53, %52 : vector<16x32xf32>
      %55 = arith.mulf %17, %54 : vector<16x32xf32>
      %cst_30 = arith.constant dense<0.000000e+00> : vector<16xf32>
      %56 = vector.multi_reduction <add>, %55, %cst_30 [1] : vector<16x32xf32> to vector<16xf32>
      %57 = vector.shape_cast %56 : vector<16xf32> to vector<16x1xf32>
      %cst_31 = arith.constant 3.200000e+01 : f32
      %58 = vector.broadcast %cst_31 : f32 to vector<16x1xf32>
      %59 = arith.divf %57, %58 : vector<16x1xf32>
      %60 = vector.broadcast %59 : vector<16x1xf32> to vector<16x32xf32>
      %61 = arith.subf %55, %60 : vector<16x32xf32>
      %62 = arith.mulf %61, %61 : vector<16x32xf32>
      %cst_32 = arith.constant dense<0.000000e+00> : vector<16xf32>
      %63 = vector.multi_reduction <add>, %62, %cst_32 [1] : vector<16x32xf32> to vector<16xf32>
      %64 = vector.shape_cast %63 : vector<16xf32> to vector<16x1xf32>
      %cst_33 = arith.constant 3.200000e+01 : f32
      %65 = vector.broadcast %cst_33 : f32 to vector<16x1xf32>
      %66 = arith.divf %64, %65 : vector<16x1xf32>
      %cst_34 = arith.constant 9.99999996E-13 : f32
      %67 = vector.broadcast %cst_34 : f32 to vector<16x1xf32>
      %68 = arith.addf %66, %67 : vector<16x1xf32>
      %69 = math.rsqrt %68 : vector<16x1xf32>
      %70 = vector.broadcast %69 : vector<16x1xf32> to vector<16x32xf32>
      %71 = arith.mulf %61, %70 : vector<16x32xf32>
      %c0_35 = arith.constant 0 : index
      %c0_36 = arith.constant 0 : index
      %72 = vector.load %arg5[%c0_35, %c0_36] : memref<1x32xf32, #tpu.memory_space<vmem>>, vector<1x32xf32>
      %73 = vector.broadcast %72 : vector<1x32xf32> to vector<16x32xf32>
      %74 = arith.mulf %71, %73 : vector<16x32xf32>
      %c0_37 = arith.constant 0 : index
      %c0_38 = arith.constant 0 : index
      %75 = vector.load %arg6[%c0_37, %c0_38] : memref<1x32xf32, #tpu.memory_space<vmem>>, vector<1x32xf32>
      %76 = vector.broadcast %75 : vector<1x32xf32> to vector<16x32xf32>
      %77 = arith.addf %74, %76 : vector<16x32xf32>
      %78 = arith.truncf %77 : vector<16x32xf32> to vector<16x32xbf16>
      %c0_39 = arith.constant 0 : index
      %c0_40 = arith.constant 0 : index
      %79 = vector.load %arg10[%c0_39, %c0_40] : memref<16x32xbf16, #tpu.memory_space<vmem>>, vector<16x32xbf16>
      tpu.vector_store %arg10[%c0_39, %c0_40], %78 {strides = array<i32>} : memref<16x32xbf16, #tpu.memory_space<vmem>>, vector<16x32xbf16>,
    } else {
    }
    %c0 = arith.constant 0 : index
    %c0_1 = arith.constant 0 : index
    %3 = vector.load %arg10[%c0, %c0_1] : memref<16x32xbf16, #tpu.memory_space<vmem>>, vector<16x32xbf16>
    %c0_2 = arith.constant 0 : index
    %c0_3 = arith.constant 0 : index
    %4 = vector.load %arg7[%c0_2, %c0_3] : memref<128x32xbf16, #tpu.memory_space<vmem>>, vector<128x32xbf16>
    %cst = arith.constant dense<0.000000e+00> : vector<16x128xf32>
    %5 = tpu.matmul %3, %4, %cst {dimension_numbers = #tpu.dot_dimension_numbers<[1], [1], [0], [0], [0, 0, 1, 0], [], []>} : vector<16x32xbf16>, vector<128x32xbf16>, vector<16x128xf32> -> vector<16x128xf32>
    %c0_4 = arith.constant 0 : index
    %c0_5 = arith.constant 0 : index
    %6 = vector.load %arg8[%c0_4, %c0_5] : memref<1x128xf32, #tpu.memory_space<vmem>>, vector<1x128xf32>
    %7 = vector.broadcast %6 : vector<1x128xf32> to vector<16x128xf32>
    %8 = arith.addf %5, %7 : vector<16x128xf32>
    %c0_6 = arith.constant 0 : index
    %c0_7 = arith.constant 0 : index
    %9 = vector.load %arg9[%c0_6, %c0_7] : memref<16x128xf32, #tpu.memory_space<vmem>>, vector<16x128xf32>
    tpu.vector_store %arg9[%c0_6, %c0_7], %8 {strides = array<i32>} : memref<16x128xf32, #tpu.memory_space<vmem>>, vector<16x128xf32>,
    return
  }
  func.func @transform_0(%arg0: i32, %arg1: i32) -> (i32, i32) {
    %c0_i32 = arith.constant 0 : i32
    %c0_i32_0 = arith.constant 0 : i32
    return %arg0, %c0_i32 : i32, i32
  }
  func.func @transform_1(%arg0: i32, %arg1: i32) -> (i32, i32) {
    %c0_i32 = arith.constant 0 : i32
    %c0_i32_0 = arith.constant 0 : i32
    %c0_i32_1 = arith.constant 0 : i32
    return %c0_i32, %c0_i32_0 : i32, i32
  }
  func.func @transform_2(%arg0: i32, %arg1: i32) -> (i32, i32) {
    %c0_i32 = arith.constant 0 : i32
    %c0_i32_0 = arith.constant 0 : i32
    %c0_i32_1 = arith.constant 0 : i32
    return %c0_i32, %c0_i32_0 : i32, i32
  }
  func.func @transform_3(%arg0: i32, %arg1: i32) -> (i32, i32) {
    %c0_i32 = arith.constant 0 : i32
    %c0_i32_0 = arith.constant 0 : i32
    %c0_i32_1 = arith.constant 0 : i32
    return %c0_i32, %c0_i32_0 : i32, i32
  }
  func.func @transform_4(%arg0: i32, %arg1: i32) -> (i32, i32) {
    %c0_i32 = arith.constant 0 : i32
    %c0_i32_0 = arith.constant 0 : i32
    %c0_i32_1 = arith.constant 0 : i32
    return %c0_i32, %c0_i32_0 : i32, i32
  }
  func.func @transform_5(%arg0: i32, %arg1: i32) -> (i32, i32) {
    %c0_i32 = arith.constant 0 : i32
    %c0_i32_0 = arith.constant 0 : i32
    return %arg1, %c0_i32 : i32, i32
  }
  func.func @transform_6(%arg0: i32, %arg1: i32) -> (i32, i32) {
    %c0_i32 = arith.constant 0 : i32
    %c0_i32_0 = arith.constant 0 : i32
    return %c0_i32, %arg1 : i32, i32
  }
  func.func @transform_7(%arg0: i32, %arg1: i32) -> (i32, i32) {
    %c0_i32 = arith.constant 0 : i32
    return %arg0, %arg1 : i32, i32
  }
}

</mosaic_0001>

<llo_original>
// kernel: tpu_custom_call.1
$region0: #{tpu_custom_call.1}
  #allocation0 [shape = 'u32[]', space=smem, size = 0x4, offset = 0x4, fixed_abs, tag = 'smem constant byte address 0x4 - core index']
  #allocation1 [shape = 'u32[72,128]{1,0:T(1,128)}', space=vmem, size = 0x9000, scoped, tag = 'internal scratch']
  #allocation2 [shape = 'bf16[16,32]{1,0:T(8,128)(2,1)}', space=vmem, size = 0x1000, scoped, tag = 'scratch operand']
  %s0 = inlined_call_operand.vmem [shape: bf16[16,32], index: 0, kind: input, shape index: {}]
  %s1 = inlined_call_operand.vmem [shape: bf16[32,32], index: 1, kind: input, shape index: {}]
  %s2 = inlined_call_operand.vmem [shape: f32[1,32], index: 2, kind: input, shape index: {}]
  %s3 = inlined_call_operand.vmem [shape: f32[1,32], index: 3, kind: input, shape index: {}]
  %s4 = inlined_call_operand.vmem [shape: f32[1,32], index: 4, kind: input, shape index: {}]
  %s5 = inlined_call_operand.vmem [shape: bf16[128,32], index: 5, kind: input, shape index: {}]
  %s6 = inlined_call_operand.vmem [shape: f32[1,128], index: 6, kind: input, shape index: {}]
  %s7 = inlined_call_operand.hbm [shape: f32[16,128], index: 7, kind: output, shape index: {}]
  %s8 = sld [smem:[#allocation0]]
  $region42: #{tpu_custom_call.1} parent=0
    _
  %s10 = ssub.s32 1, %s8
  %s11 = scalar_select 0, %s10, %s8
  $region1: #{tpu_custom_call.1} parent=0
    #allocation3 [shape = 'u8[8192]{0}', space=vmem, size = 0x2000, scoped, tag = 'output window, operand 0, single buffered']
    #allocation4 [shape = 's32[1]{0}', space=sflag, size = 0x4, scoped, tag = 'scoped memory for tpu_custom_call.1']
    %12 = vsyncpa [#allocation4], 0
    // Predicated region
    $region2: #{tpu_custom_call.1} parent=1 // pred_check
      _
    $region3: #{tpu_custom_call.1} parent=1 // pred_check_branch
      %14 = sbr.rel (0) target = $region5
    $region4: #{tpu_custom_call.1} parent=1 // pred_region
      _
    $region5: #{tpu_custom_call.1} parent=1 // pred_fallthru
      _
    // Predicated region
    $region6: #{tpu_custom_call.1} parent=1 // pred_check
      _
    $region7: #{tpu_custom_call.1} parent=1 // pred_check_branch
      %16 = sbr.rel (0) target = $region9
    $region8: #{tpu_custom_call.1} parent=1 // pred_region
      _
    $region9: #{tpu_custom_call.1} parent=1 // pred_fallthru
      _
    // Predicated region
    $region10: #{tpu_custom_call.1} parent=1 // pred_check
      _
    $region11: #{tpu_custom_call.1} parent=1 // pred_check_branch
      %18 = sbr.rel (0) target = $region13
    $region12: #{tpu_custom_call.1} parent=1 // pred_region
      _
    $region13: #{tpu_custom_call.1} parent=1 // pred_fallthru
      _
    // Predicated region
    $region14: #{tpu_custom_call.1} parent=1 // pred_check
      _
    $region15: #{tpu_custom_call.1} parent=1 // pred_check_branch
      %20 = sbr.rel (0) target = $region17
    $region16: #{tpu_custom_call.1} parent=1 // pred_region
      _
    $region17: #{tpu_custom_call.1} parent=1 // pred_fallthru
      _
    // Predicated region
    $region18: #{tpu_custom_call.1} parent=1 // pred_check
      _
    $region19: #{tpu_custom_call.1} parent=1 // pred_check_branch
      %22 = sbr.rel (0) target = $region21
    $region20: #{tpu_custom_call.1} parent=1 // pred_region
      _
    $region21: #{tpu_custom_call.1} parent=1 // pred_fallthru
      _
    // Predicated region
    $region22: #{tpu_custom_call.1} parent=1 // pred_check
      _
    $region23: #{tpu_custom_call.1} parent=1 // pred_check_branch
      %24 = sbr.rel (0) target = $region25
    $region24: #{tpu_custom_call.1} parent=1 // pred_region
      _
    $region25: #{tpu_custom_call.1} parent=1 // pred_fallthru
      _
    // Predicated region
    $region26: #{tpu_custom_call.1} parent=1 // pred_check
      _
    $region27: #{tpu_custom_call.1} parent=1 // pred_check_branch
      %26 = sbr.rel (0) target = $region29
    $region28: #{tpu_custom_call.1} parent=1 // pred_region
      _
    $region29: #{tpu_custom_call.1} parent=1 // pred_fallthru
      _
    %p28 = scmp.eq.s32.totalorder 0, 0
    // Predicated region
    $region30: #{tpu_custom_call.1} parent=1 // pred_check
      %p29 = pneg %p28
    $region31: #{tpu_custom_call.1} parent=1 // pred_check_branch
      %31 = sbr.rel (%p29) target = $region33
    $region32: #{tpu_custom_call.1} parent=1 // pred_region
      %v32 = vld [vmem:[%s0] sm:$0xf]
      %v33 = vld [vmem:[%s0 + $0x4] sm:$0xf]
      %v34 = vld [vmem:[%s1] sm:$0xf]
      %v35 = vld [vmem:[%s1 + $0x4] sm:$0xf]
      %v36 = vld [vmem:[%s1 + $0x8] sm:$0xf]
      %v37 = vld [vmem:[%s1 + $0xc] sm:$0xf]
      %v38 = vld [vmem:[%s2] sm:$0x1]
      %v40 = vperm.slane %v38, 0
      %v44 = vunpack.c.l.b16 %v32
      %v45 = vunpack.c.l.b16 %v33
      %v46 = vpack.c.b16 %v45, %v44
      %v51 = vunpack.c.l.b16 %v34
      %v52 = vunpack.c.l.b16 %v35
      %v53 = vunpack.c.l.b16 %v36
      %v54 = vunpack.c.l.b16 %v37
      %v55 = vpack.c.b16 %v52, %v51
      %v56 = vpack.c.b16 %v54, %v53
      %vm57 = vcmask 261120
      %v59 = vsel %vm57, %v46, 0
      %v62 = vsel %vm57, %v55, 0
      %v65 = vsel %vm57, %v56, 0
      %67 = vmatpush.bf16.xpose.msra.mxu0 0
      %68 = vmatpush.bf16.xpose.msra.mxu0 0
      %69 = vmatpush.bf16.xpose.msra.mxu0 0
      %70 = vmatpush.bf16.xpose.msra.mxu0 0
      %71 = vmatpush.bf16.xpose.msra.mxu0 0
      %72 = vmatpush.bf16.xpose.msra.mxu0 0
      %73 = vmatpush.bf16.xpose.msra.mxu0 %v65
      %74 = vmatpush.bf16.xpose.msra.mxu0 %v62
      %75 = vmatmul.bf16.gmra.mxu0 %v59
      %v76 = vpop.f32.mrf.mxu0
      %v77 = vadd.f32 %v40, %v76
      %v78 = vpop.f32.mrf.mxu0
      %v79 = vadd.f32 %v40, %v78
      %80 = vdwg.mxu0
      %v81 = vmul.f32 %v77, 0.5
      %v82 = vmul.f32 %v79, 0.5
      %v83 = vmul.f32 %v77, 0.70710677
      %v84 = vmul.f32 %v79, 0.70710677
      %v85 = vand.u32 2147483647, %v83
      %v86 = vand.u32 2147483647, %v84
      %v87 = vmul.f32 %v85, 0.3275911
      %v88 = vmul.f32 %v86, 0.3275911
      %v89 = vadd.f32 %v87, 1.0
      %v90 = vadd.f32 %v88, 1.0
      %v91 = vrcp.pop %v89
      %v92 = vmul.f32 %v89, %v91
      %v93 = vsub.f32 1.0, %v92
      %v94 = vmul.f32 %v91, %v93
      %v95 = vadd.f32 %v91, %v94
      %vm96 = vweird.f32 %v89
      %vm97 = vweird.f32 %v91
      %vm98 = vmor %vm96, %vm97
      %v99 = vsel %vm98, %v91, %v95
      %v100 = vand.u32 2147483647, %v89
      %vm101 = vcmp.eq.f32.partialorder %v100, 8.507059e+37
      %v102 = vand.u32 %v89, 2147483648
      %v103 = vor.u32 1.1754944e-38, %v102
      %v104 = vsel %vm101, %v103, %v99
      %v105 = vmul.f32 1.0, %v104
      %v106 = vrcp.pop %v90
      %v107 = vmul.f32 %v90, %v106
      %v108 = vsub.f32 1.0, %v107
      %v109 = vmul.f32 %v106, %v108
      %v110 = vadd.f32 %v106, %v109
      %vm111 = vweird.f32 %v90
      %vm112 = vweird.f32 %v106
      %vm113 = vmor %vm111, %vm112
      %v114 = vsel %vm113, %v106, %v110
      %v115 = vand.u32 2147483647, %v90
      %vm116 = vcmp.eq.f32.partialorder %v115, 8.507059e+37
      %v117 = vand.u32 %v90, 2147483648
      %v118 = vor.u32 1.1754944e-38, %v117
      %v119 = vsel %vm116, %v118, %v114
      %v120 = vmul.f32 1.0, %v119
      %v121 = vmul.f32 %v105, 1.0614054
      %v122 = vmul.f32 %v120, 1.0614054
      %v123 = vadd.f32 %v121, -1.4531521
      %v124 = vadd.f32 %v122, -1.4531521
      %v125 = vmul.f32 %v123, %v105
      %v126 = vmul.f32 %v124, %v120
      %v127 = vadd.f32 %v125, 1.4214138
      %v128 = vadd.f32 %v126, 1.4214138
      %v129 = vmul.f32 %v127, %v105
      %v130 = vmul.f32 %v128, %v120
      %v131 = vadd.f32 %v129, -0.28449672
      %v132 = vadd.f32 %v130, -0.28449672
      %v133 = vmul.f32 %v131, %v105
      %v134 = vmul.f32 %v132, %v120
      %v135 = vadd.f32 %v133, 0.2548296
      %v136 = vadd.f32 %v134, 0.2548296
      %v137 = vmul.f32 %v135, %v105
      %v138 = vmul.f32 %v136, %v120
      %v139 = vsub.f32 0.0, %v85
      %v140 = vsub.f32 0.0, %v86
      %v141 = vmul.f32 %v139, %v85
      %v142 = vmul.f32 %v140, %v86
      %v143 = vmul.f32 %v141, 1.442695
      %v144 = vpow.pop %v143
      %v145 = vmul.f32 %v142, 1.442695
      %v146 = vpow.pop %v145
      %v147 = vmul.f32 %v137, %v144
      %v148 = vmul.f32 %v138, %v146
      %v149 = vsub.f32 1.0, %v147
      %v150 = vsub.f32 1.0, %v148
      %vm151 = vcmp.ge.f32.partialorder %v83, 0.0
      %vm152 = vcmp.ge.f32.partialorder %v84, 0.0
      %v153 = vsub.f32 0.0, %v149
      %v154 = vsub.f32 0.0, %v150
      %v155 = vsel %vm151, %v149, %v153
      %v156 = vsel %vm152, %v150, %v154
      %v157 = vadd.f32 %v155, 1.0
      %v158 = vadd.f32 %v156, 1.0
      %v159 = vmul.f32 %v81, %v157
      %v160 = vmul.f32 %v82, %v158
      %v161 = vsel %vm57, %v159, 0.0
      %162 = vadd.xlane.f32.xlu0 %v161
      %v163 = vpop.xlane.xlu0 %162
      %v164 = vsel %vm57, %v160, 0.0
      %165 = vadd.xlane.f32.xlu0 %v164
      %v166 = vpop.xlane.xlu0 %165
      %v167 = vrcp.pop 32.0
      %v168 = vmul.f32 32.0, %v167
      %v169 = vsub.f32 1.0, %v168
      %v170 = vmul.f32 %v167, %v169
      %v171 = vadd.f32 %v167, %v170
      %vm172 = vweird.f32 %v167
      %v173 = vsel %vm172, %v167, %v171
      %v174 = vmul.f32 %v163, %v173
      %v175 = vmul.f32 %v166, %v173
      %v176 = vsub.f32 %v159, %v174
      %v177 = vsub.f32 %v160, %v175
      %v178 = vmul.f32 %v176, %v176
      %v179 = vmul.f32 %v177, %v177
      %v180 = vsel %vm57, %v178, 0.0
      %181 = vadd.xlane.f32.xlu0 %v180
      %v182 = vpop.xlane.xlu0 %181
      %v183 = vsel %vm57, %v179, 0.0
      %184 = vadd.xlane.f32.xlu0 %v183
      %v185 = vpop.xlane.xlu0 %184
      %v186 = vmul.f32 %v182, %v173
      %v187 = vmul.f32 %v185, %v173
      %v188 = vadd.f32 %v186, 1e-12
      %v189 = vadd.f32 %v187, 1e-12
      %v190 = vrsqrt.pop %v188
      %v191 = vmul.f32 %v190, %v188
      %v192 = vmul.f32 %v191, %v190
      %v193 = vmul.f32 0.5, %v192
      %v194 = vsub.f32 1.5, %v193
      %v195 = vmul.f32 %v190, %v194
      %vm196 = vweird.f32 %v188
      %vm197 = vweird.f32 %v190
      %vm198 = vmor %vm196, %vm197
      %v199 = vsel %vm198, %v190, %v195
      %v200 = vrsqrt.pop %v189
      %v201 = vmul.f32 %v200, %v189
      %v202 = vmul.f32 %v201, %v200
      %v203 = vmul.f32 0.5, %v202
      %v204 = vsub.f32 1.5, %v203
      %v205 = vmul.f32 %v200, %v204
      %vm206 = vweird.f32 %v189
      %vm207 = vweird.f32 %v200
      %vm208 = vmor %vm206, %vm207
      %v209 = vsel %vm208, %v200, %v205
      %v210 = vmul.f32 %v176, %v199
      %v211 = vmul.f32 %v177, %v209
      %v212 = vld [vmem:[%s3] sm:$0x1]
      %v214 = vperm.slane %v212, 0
      %v216 = vmul.f32 %v210, %v214
      %v217 = vmul.f32 %v211, %v214
      %v218 = vld [vmem:[%s4] sm:$0x1]
      %v220 = vperm.slane %v218, 0
      %v222 = vadd.f32 %v216, %v220
      %v223 = vadd.f32 %v217, %v220
      %v224 = vpack.c.bf16 %v222, %v222
      %v225 = vpack.c.bf16 %v223, %v223
      %vm226 = vcmask 257024
      %227 = vst.msk [vmem:[#allocation2] sm:$0xf] %vm226, %v224
      %228 = vst.msk [vmem:[#allocation2 + $0x4] sm:$0xf] %vm226, %v225
    $region33: #{tpu_custom_call.1} parent=1 // pred_fallthru
      _
    %v229 = vld [vmem:[#allocation2] sm:$0xf]
    %v230 = vld [vmem:[#allocation2 + $0x4] sm:$0xf]
    %v231 = vld [vmem:[%s5] sm:$0xf]
    %v232 = vld [vmem:[%s5 + $0x4] sm:$0xf]
    %v233 = vld [vmem:[%s5 + $0x8] sm:$0xf]
    %v234 = vld [vmem:[%s5 + $0xc] sm:$0xf]
    %v235 = vld [vmem:[%s5 + $0x10] sm:$0xf]
    %v236 = vld [vmem:[%s5 + $0x14] sm:$0xf]
    %v237 = vld [vmem:[%s5 + $0x18] sm:$0xf]
    %v238 = vld [vmem:[%s5 + $0x1c] sm:$0xf]
    %v239 = vld [vmem:[%s5 + $0x20] sm:$0xf]
    %v240 = vld [vmem:[%s5 + $0x24] sm:$0xf]
    %v241 = vld [vmem:[%s5 + $0x28] sm:$0xf]
    %v242 = vld [vmem:[%s5 + $0x2c] sm:$0xf]
    %v243 = vld [vmem:[%s5 + $0x30] sm:$0xf]
    %v244 = vld [vmem:[%s5 + $0x34] sm:$0xf]
    %v245 = vld [vmem:[%s5 + $0x38] sm:$0xf]
    %v246 = vld [vmem:[%s5 + $0x3c] sm:$0xf]
    %v247 = vld [vmem:[%s6] sm:$0x1]
    %v249 = vperm.slane %v247, 0
    %v253 = vunpack.c.l.b16 %v229
    %v254 = vunpack.c.l.b16 %v230
    %v255 = vpack.c.b16 %v254, %v253
    %v272 = vunpack.c.l.b16 %v231
    %v273 = vunpack.c.l.b16 %v232
    %v274 = vunpack.c.l.b16 %v233
    %v275 = vunpack.c.l.b16 %v234
    %v276 = vunpack.c.l.b16 %v235
    %v277 = vunpack.c.l.b16 %v236
    %v278 = vunpack.c.l.b16 %v237
    %v279 = vunpack.c.l.b16 %v238
    %v280 = vunpack.c.l.b16 %v239
    %v281 = vunpack.c.l.b16 %v240
    %v282 = vunpack.c.l.b16 %v241
    %v283 = vunpack.c.l.b16 %v242
    %v284 = vunpack.c.l.b16 %v243
    %v285 = vunpack.c.l.b16 %v244
    %v286 = vunpack.c.l.b16 %v245
    %v287 = vunpack.c.l.b16 %v246
    %v288 = vpack.c.b16 %v273, %v272
    %v289 = vpack.c.b16 %v275, %v274
    %v290 = vpack.c.b16 %v277, %v276
    %v291 = vpack.c.b16 %v279, %v278
    %v292 = vpack.c.b16 %v281, %v280
    %v293 = vpack.c.b16 %v283, %v282
    %v294 = vpack.c.b16 %v285, %v284
    %v295 = vpack.c.b16 %v287, %v286
    %vm296 = vcmask 261120
    %v298 = vsel %vm296, %v255, 0
    %v301 = vsel %vm296, %v288, 0
    %v304 = vsel %vm296, %v289, 0
    %v307 = vsel %vm296, %v290, 0
    %v310 = vsel %vm296, %v291, 0
    %v313 = vsel %vm296, %v292, 0
    %v316 = vsel %vm296, %v293, 0
    %v319 = vsel %vm296, %v294, 0
    %v322 = vsel %vm296, %v295, 0
    %324 = vmatpush.bf16.xpose.msra.mxu0 %v322
    %325 = vmatpush.bf16.xpose.msra.mxu0 %v319
    %326 = vmatpush.bf16.xpose.msra.mxu0 %v316
    %327 = vmatpush.bf16.xpose.msra.mxu0 %v313
    %328 = vmatpush.bf16.xpose.msra.mxu0 %v310
    %329 = vmatpush.bf16.xpose.msra.mxu0 %v307
    %330 = vmatpush.bf16.xpose.msra.mxu0 %v304
    %331 = vmatpush.bf16.xpose.msra.mxu0 %v301
    %332 = vmatmul.bf16.gmra.mxu0 %v298
    %v333 = vpop.f32.mrf.mxu0
    %v334 = vadd.f32 %v249, %v333
    %v335 = vpop.f32.mrf.mxu0
    %v336 = vadd.f32 %v249, %v335
    %337 = vdwg.mxu0
    %338 = vst [vmem:[#allocation3] sm:$0xff] %v334
    %339 = vst [vmem:[#allocation3 + $0x8] sm:$0xff] %v336
    // Predicated region
    $region34: #{tpu_custom_call.1} parent=1 // pred_check
      _
    $region35: #{tpu_custom_call.1} parent=1 // pred_check_branch
      %341 = sbr.rel (0) target = $region37
    $region36: #{tpu_custom_call.1} parent=1 // pred_region
      %343 = vsyncadd [#allocation4], 0
      %s344 = sshll.u32 [#allocation3], 4
      %s345 = int_to_ptr.vmem [resolvable:$true] %s344
      %s346 = sshll.u32 %s7, 4
      %s347 = int_to_ptr.hbm [resolvable:$true] %s346
      %352 = dma.vmem_to_hbm [thread:$0]  %s345, 256, %s347, [#allocation4], 128, 128, 8
    $region37: #{tpu_custom_call.1} parent=1 // pred_fallthru
      _
    // Predicated region
    $region38: #{tpu_custom_call.1} parent=1 // pred_check
      _
    $region39: #{tpu_custom_call.1} parent=1 // pred_check_branch
      %354 = sbr.rel (0) target = $region41
    $region40: #{tpu_custom_call.1} parent=1 // pred_region
      %356 = dma.done [#allocation4], 256
    $region41: #{tpu_custom_call.1} parent=1 // pred_fallthru
      _
    %357 = vsyncpa [#allocation4], 1

</llo_original>
